<compile_context>
chip_gen: v7x
topology: tpu7x:2x2x1
jax: 0.10.0
libtpu: 0.0.40
codegen_flags: <defaults>
</compile_context>

<pallas_src>
import jax
import jax.numpy as jnp
from jax.experimental import pallas as pl
from jax.experimental.pallas import tpu as pltpu


def _stgcn_kernel(x_ref, abig_ref, wg_ref, bg_ref, wt_ref, bt_ref,
                  ml_ref, mr_ref, o_ref):
    # x_ref:    (C_in, NTV)        f32   activations, lane axis = N*T*V
    # abig_ref: (NTV, NTV)         bf16  kron(I_{N*T}, A) block-diagonal mixing
    # wg_ref:   (C_out, C_in)      f32   1x1 conv weight
    # bg_ref:   (C_out, 1)         f32   1x1 conv bias
    # wt_ref:   (3, C_out, C_out)  bf16  (1,3) conv taps (k = -1, 0, +1)
    # bt_ref:   (C_out, 1)         f32   (1,3) conv bias
    # ml_ref:   (1, NTV)           f32   left-neighbor validity mask
    # mr_ref:   (1, NTV)           f32   right-neighbor validity mask
    # o_ref:    (C_out, NTV)       f32
    x = x_ref[...]                                   # (C_in, NTV)
    wg = wg_ref[...]                                 # (C_out, C_in)
    c_in = x.shape[0]

    # 1x1 conv (K = C_in = 2): VPU broadcast FMAs, no MXU round-trip.
    u = wg[:, 0:1] * x[0:1, :]                       # (C_out, NTV) f32
    for c in range(1, c_in):
        u = u + wg[:, c:c + 1] * x[c:c + 1, :]

    # Graph mixing over nodes as one well-shaped MXU matmul (bf16 in, f32 acc):
    #   (Wg @ x) @ kron(I, A) == Wg @ (x @ kron(I, A))   (linear reassociation)
    y = jnp.dot(u.astype(jnp.bfloat16), abig_ref[...],
                preferred_element_type=jnp.float32) + bg_ref[...]

    # ReLU
    y = jnp.maximum(y, 0.0)                          # (C_out, NTV) f32

    # (1,3) conv along V with zero padding 1, on the flattened N*T*V axis.
    # Masks zero the shifted values at every V boundary, so shifts neither leak
    # across frames/batch elements nor wrap around the slab edge.
    ntv = y.shape[1]
    y_left = pltpu.roll(y, shift=1, axis=1) * ml_ref[...]          # y[:, w-1]
    y_right = pltpu.roll(y, shift=ntv - 1, axis=1) * mr_ref[...]   # y[:, w+1]

    # Three accumulated K=C_out dots (bf16 MXU inputs, f32 accumulation).
    z = jnp.dot(wt_ref[0], y_left.astype(jnp.bfloat16),
                preferred_element_type=jnp.float32)
    z = z + jnp.dot(wt_ref[1], y.astype(jnp.bfloat16),
                    preferred_element_type=jnp.float32)
    z = z + jnp.dot(wt_ref[2], y_right.astype(jnp.bfloat16),
                    preferred_element_type=jnp.float32)

    o_ref[...] = z + bt_ref[...]


@jax.jit
def stgcn_forward(x, A, wg, bg, wt, bt):
    """x: (N, C_in, T, V) f32, A: (V, V), wg: (C_out, C_in), bg: (C_out,),
       wt: (C_out, C_out, 3), bt: (C_out,). Returns (N, C_out, T, V) f32."""
    N, C_in, T, V = x.shape
    C_out = wg.shape[0]
    NTV = N * T * V

    # Wrapper-side re-layout (fused by jit):
    x_slab = jnp.transpose(x, (1, 0, 2, 3)).reshape(C_in, NTV).astype(jnp.float32)
    a_big = jnp.kron(jnp.eye(N * T, dtype=jnp.float32),
                     A.astype(jnp.float32)).astype(jnp.bfloat16)    # (NTV, NTV)
    wt_taps = jnp.moveaxis(wt, 2, 0).astype(jnp.bfloat16)           # (3, C_out, C_out)
    wg_f = wg.astype(jnp.float32)
    bg2 = bg.reshape(C_out, 1).astype(jnp.float32)
    bt2 = bt.reshape(C_out, 1).astype(jnp.float32)

    # V-boundary masks (precomputed; 0 where the shifted neighbor is invalid).
    col = jnp.arange(NTV, dtype=jnp.int32)
    vpos = col % V
    mask_left = (vpos != 0).astype(jnp.float32).reshape(1, NTV)
    mask_right = (vpos != V - 1).astype(jnp.float32).reshape(1, NTV)

    # Whole problem is ~a few hundred KiB -> single invocation, everything in
    # VMEM, no grid / no per-step pipeline overhead.
    out = pl.pallas_call(
        _stgcn_kernel,
        out_shape=jax.ShapeDtypeStruct((C_out, NTV), jnp.float32),
    )(x_slab, a_big, wg_f, bg2, wt_taps, bt2, mask_left, mask_right)

    # back to NCHW
    return jnp.transpose(out.reshape(C_out, N, T, V), (1, 0, 2, 3))


def stgcn_reference(x, A, wg, bg, wt, bt):
    """Pure-JAX f32 reference of the PyTorch forward for verification."""
    hp = jax.lax.Precision.HIGHEST
    xa = jnp.einsum('nctv,vw->nctw', x, A, precision=hp)
    y = jnp.einsum('oc,nctw->notw', wg, xa, precision=hp) + bg[None, :, None, None]
    y = jnp.maximum(y, 0.0)
    V = x.shape[-1]
    yp = jnp.pad(y, ((0, 0), (0, 0), (0, 0), (1, 1)))
    z = sum(jnp.einsum('oc,nctw->notw', wt[:, :, k], yp[..., k:k + V], precision=hp)
            for k in range(3))
    return z + bt[None, :, None, None]


if __name__ == "__main__":
    # small shapes consistent with the module: in_channels=2, out_channels=64
    N, C_in, C_out, T, V = 2, 2, 64, 8, 16        # N*T*V = 256 -> 2x128 lane slab

    key = jax.random.PRNGKey(0)
    kx, ka, kwg, kbg, kwt, kbt = jax.random.split(key, 6)

    x = jax.random.normal(kx, (N, C_in, T, V), dtype=jnp.float32)
    A = jax.random.normal(ka, (V, V), dtype=jnp.float32)

    # deterministic parameter init (synthetic, not a checkpoint)
    wg = 0.1 * jax.random.normal(kwg, (C_out, C_in), dtype=jnp.float32)      # Conv2d 1x1
    bg = 0.1 * jax.random.normal(kbg, (C_out,), dtype=jnp.float32)
    wt = 0.1 * jax.random.normal(kwt, (C_out, C_out, 3), dtype=jnp.float32)  # Conv2d (1,3)
    bt = 0.1 * jax.random.normal(kbt, (C_out,), dtype=jnp.float32)

    out = stgcn_forward(x, A, wg, bg, wt, bt)
    out = jax.block_until_ready(out)
    assert out.shape == (N, C_out, T, V)

    # Tolerances account for bf16 MXU inputs (f32 accumulation) vs f32 reference.
    ref = stgcn_reference(x, A, wg, bg, wt, bt)
    max_err = float(jnp.max(jnp.abs(out - ref)))
    rel_err = float(jnp.linalg.norm(out - ref) / jnp.linalg.norm(ref))
    assert max_err < 1e-1 and rel_err < 1e-2, (max_err, rel_err)

    print("KERNEL_OK")
</pallas_src>

<mosaic_0001>
module attributes {stable_mosaic.version = 11 : i64} {
  func.func @_stgcn_kernel(%arg0: memref<2x256xf32, #tpu.memory_space<vmem>>, %arg1: memref<256x256xbf16, #tpu.memory_space<vmem>>, %arg2: memref<64x2xf32, #tpu.memory_space<vmem>>, %arg3: memref<64x1xf32, #tpu.memory_space<vmem>>, %arg4: memref<3x64x64xbf16, #tpu.memory_space<vmem>>, %arg5: memref<64x1xf32, #tpu.memory_space<vmem>>, %arg6: memref<1x256xf32, #tpu.memory_space<vmem>>, %arg7: memref<1x256xf32, #tpu.memory_space<vmem>>, %arg8: memref<64x256xf32, #tpu.memory_space<vmem>>) attributes {dimension_semantics = [], scalar_prefetch = 0 : i64, scratch_operands = 0 : i64, tpu.core_type = #tpu.core_type<tc>} {
    %c0 = arith.constant 0 : index
    %c0_0 = arith.constant 0 : index
    %0 = vector.load %arg0[%c0, %c0_0] : memref<2x256xf32, #tpu.memory_space<vmem>>, vector<2x256xf32>
    %c0_1 = arith.constant 0 : index
    %c0_2 = arith.constant 0 : index
    %1 = vector.load %arg2[%c0_1, %c0_2] : memref<64x2xf32, #tpu.memory_space<vmem>>, vector<64x2xf32>
    %2 = vector.extract_strided_slice %1 {offsets = [0, 0], sizes = [64, 1], strides = [1, 1]} : vector<64x2xf32> to vector<64x1xf32>
    %3 = vector.extract_strided_slice %0 {offsets = [0, 0], sizes = [1, 256], strides = [1, 1]} : vector<2x256xf32> to vector<1x256xf32>
    %4 = vector.broadcast %2 : vector<64x1xf32> to vector<64x256xf32>
    %5 = vector.broadcast %3 : vector<1x256xf32> to vector<64x256xf32>
    %6 = arith.mulf %4, %5 : vector<64x256xf32>
    %7 = vector.extract_strided_slice %1 {offsets = [0, 1], sizes = [64, 1], strides = [1, 1]} : vector<64x2xf32> to vector<64x1xf32>
    %8 = vector.extract_strided_slice %0 {offsets = [1, 0], sizes = [1, 256], strides = [1, 1]} : vector<2x256xf32> to vector<1x256xf32>
    %9 = vector.broadcast %7 : vector<64x1xf32> to vector<64x256xf32>
    %10 = vector.broadcast %8 : vector<1x256xf32> to vector<64x256xf32>
    %11 = arith.mulf %9, %10 : vector<64x256xf32>
    %12 = arith.addf %6, %11 : vector<64x256xf32>
    %13 = arith.truncf %12 : vector<64x256xf32> to vector<64x256xbf16>
    %c0_3 = arith.constant 0 : index
    %c0_4 = arith.constant 0 : index
    %14 = vector.load %arg1[%c0_3, %c0_4] : memref<256x256xbf16, #tpu.memory_space<vmem>>, vector<256x256xbf16>
    %cst = arith.constant dense<0.000000e+00> : vector<64x256xf32>
    %15 = tpu.matmul %13, %14, %cst {dimension_numbers = #tpu.dot_dimension_numbers<[1], [0], [0], [1], [0, 0, 1, 1], [], []>} : vector<64x256xbf16>, vector<256x256xbf16>, vector<64x256xf32> -> vector<64x256xf32>
    %c0_5 = arith.constant 0 : index
    %c0_6 = arith.constant 0 : index
    %16 = vector.load %arg3[%c0_5, %c0_6] : memref<64x1xf32, #tpu.memory_space<vmem>>, vector<64x1xf32>
    %17 = vector.broadcast %16 : vector<64x1xf32> to vector<64x256xf32>
    %18 = arith.addf %15, %17 : vector<64x256xf32>
    %cst_7 = arith.constant 0.000000e+00 : f32
    %19 = vector.broadcast %cst_7 : f32 to vector<64x256xf32>
    %20 = arith.maximumf %18, %19 : vector<64x256xf32>
    %c1_i32 = arith.constant 1 : i32
    %21 = tpu.dynamic_rotate %20 by %c1_i32 dim 1 : vector<64x256xf32>, i32 -> vector<64x256xf32>
    %c0_8 = arith.constant 0 : index
    %c0_9 = arith.constant 0 : index
    %22 = vector.load %arg6[%c0_8, %c0_9] : memref<1x256xf32, #tpu.memory_space<vmem>>, vector<1x256xf32>
    %23 = vector.broadcast %22 : vector<1x256xf32> to vector<64x256xf32>
    %24 = arith.mulf %21, %23 : vector<64x256xf32>
    %c255_i32 = arith.constant 255 : i32
    %25 = tpu.dynamic_rotate %20 by %c255_i32 dim 1 : vector<64x256xf32>, i32 -> vector<64x256xf32>
    %c0_10 = arith.constant 0 : index
    %c0_11 = arith.constant 0 : index
    %26 = vector.load %arg7[%c0_10, %c0_11] : memref<1x256xf32, #tpu.memory_space<vmem>>, vector<1x256xf32>
    %27 = vector.broadcast %26 : vector<1x256xf32> to vector<64x256xf32>
    %28 = arith.mulf %25, %27 : vector<64x256xf32>
    %c0_12 = arith.constant 0 : index
    %c0_13 = arith.constant 0 : index
    %c0_14 = arith.constant 0 : index
    %29 = vector.load %arg4[%c0_12, %c0_13, %c0_14] : memref<3x64x64xbf16, #tpu.memory_space<vmem>>, vector<1x64x64xbf16>
    %30 = vector.shape_cast %29 : vector<1x64x64xbf16> to vector<64x64xbf16>
    %31 = arith.truncf %24 : vector<64x256xf32> to vector<64x256xbf16>
    %cst_15 = arith.constant dense<0.000000e+00> : vector<64x256xf32>
    %32 = tpu.matmul %30, %31, %cst_15 {dimension_numbers = #tpu.dot_dimension_numbers<[1], [0], [0], [1], [0, 0, 1, 1], [], []>} : vector<64x64xbf16>, vector<64x256xbf16>, vector<64x256xf32> -> vector<64x256xf32>
    %c1 = arith.constant 1 : index
    %c0_16 = arith.constant 0 : index
    %c0_17 = arith.constant 0 : index
    %33 = vector.load %arg4[%c1, %c0_16, %c0_17] : memref<3x64x64xbf16, #tpu.memory_space<vmem>>, vector<1x64x64xbf16>
    %34 = vector.shape_cast %33 : vector<1x64x64xbf16> to vector<64x64xbf16>
    %35 = arith.truncf %20 : vector<64x256xf32> to vector<64x256xbf16>
    %cst_18 = arith.constant dense<0.000000e+00> : vector<64x256xf32>
    %36 = tpu.matmul %34, %35, %cst_18 {dimension_numbers = #tpu.dot_dimension_numbers<[1], [0], [0], [1], [0, 0, 1, 1], [], []>} : vector<64x64xbf16>, vector<64x256xbf16>, vector<64x256xf32> -> vector<64x256xf32>
    %37 = arith.addf %32, %36 : vector<64x256xf32>
    %c2 = arith.constant 2 : index
    %c0_19 = arith.constant 0 : index
    %c0_20 = arith.constant 0 : index
    %38 = vector.load %arg4[%c2, %c0_19, %c0_20] : memref<3x64x64xbf16, #tpu.memory_space<vmem>>, vector<1x64x64xbf16>
    %39 = vector.shape_cast %38 : vector<1x64x64xbf16> to vector<64x64xbf16>
    %40 = arith.truncf %28 : vector<64x256xf32> to vector<64x256xbf16>
    %cst_21 = arith.constant dense<0.000000e+00> : vector<64x256xf32>
    %41 = tpu.matmul %39, %40, %cst_21 {dimension_numbers = #tpu.dot_dimension_numbers<[1], [0], [0], [1], [0, 0, 1, 1], [], []>} : vector<64x64xbf16>, vector<64x256xbf16>, vector<64x256xf32> -> vector<64x256xf32>
    %42 = arith.addf %37, %41 : vector<64x256xf32>
    %c0_22 = arith.constant 0 : index
    %c0_23 = arith.constant 0 : index
    %43 = vector.load %arg5[%c0_22, %c0_23] : memref<64x1xf32, #tpu.memory_space<vmem>>, vector<64x1xf32>
    %44 = vector.broadcast %43 : vector<64x1xf32> to vector<64x256xf32>
    %45 = arith.addf %42, %44 : vector<64x256xf32>
    %c0_24 = arith.constant 0 : index
    %c0_25 = arith.constant 0 : index
    %46 = vector.load %arg8[%c0_24, %c0_25] : memref<64x256xf32, #tpu.memory_space<vmem>>, vector<64x256xf32>
    tpu.vector_store %arg8[%c0_24, %c0_25], %45 {strides = array<i32>} : memref<64x256xf32, #tpu.memory_space<vmem>>, vector<64x256xf32>,
    return
  }
}

</mosaic_0001>

<llo_original>
// kernel: stgcn_forward.1
$region0: #{stgcn_forward.1}
  #allocation0 [shape = 'u32[]', space=smem, size = 0x4, offset = 0x4, fixed_abs, tag = 'smem constant byte address 0x4 - core index']
  #allocation1 [shape = 'u32[144,128]{1,0:T(1,128)}', space=vmem, size = 0x12000, scoped, tag = 'internal scratch']
  %s0 = inlined_call_operand.vmem [shape: f32[2,256], index: 0, kind: input, shape index: {}]
  %s1 = inlined_call_operand.vmem [shape: bf16[256,256], index: 1, kind: input, shape index: {}]
  %s2 = inlined_call_operand.vmem [shape: f32[64,2], index: 2, kind: input, shape index: {}]
  %s3 = inlined_call_operand.vmem [shape: f32[64,1], index: 3, kind: input, shape index: {}]
  %s4 = inlined_call_operand.vmem [shape: bf16[3,64,64], index: 4, kind: input, shape index: {}]
  %s5 = inlined_call_operand.vmem [shape: f32[64,1], index: 5, kind: input, shape index: {}]
  %s6 = inlined_call_operand.vmem [shape: f32[1,256], index: 6, kind: input, shape index: {}]
  %s7 = inlined_call_operand.vmem [shape: f32[1,256], index: 7, kind: input, shape index: {}]
  %s8 = inlined_call_operand.vmem [shape: f32[64,256], index: 8, kind: output, shape index: {}]
  %s9 = sld [smem:[#allocation0]]
  $region42: #{stgcn_forward.1} parent=0
    _
  %s11 = ssub.s32 1, %s9
  %s12 = scalar_select 0, %s11, %s9
  // Predicated region
  $region2: #{stgcn_forward.1} parent=0 // pred_check
    _
  $region3: #{stgcn_forward.1} parent=0 // pred_check_branch
    %14 = sbr.rel (0) target = $region5
  $region4: #{stgcn_forward.1} parent=0 // pred_region
    _
  $region5: #{stgcn_forward.1} parent=0 // pred_fallthru
    _
  // Predicated region
  $region6: #{stgcn_forward.1} parent=0 // pred_check
    _
  $region7: #{stgcn_forward.1} parent=0 // pred_check_branch
    %16 = sbr.rel (0) target = $region9
  $region8: #{stgcn_forward.1} parent=0 // pred_region
    _
  $region9: #{stgcn_forward.1} parent=0 // pred_fallthru
    _
  // Predicated region
  $region10: #{stgcn_forward.1} parent=0 // pred_check
    _
  $region11: #{stgcn_forward.1} parent=0 // pred_check_branch
    %18 = sbr.rel (0) target = $region13
  $region12: #{stgcn_forward.1} parent=0 // pred_region
    _
  $region13: #{stgcn_forward.1} parent=0 // pred_fallthru
    _
  // Predicated region
  $region14: #{stgcn_forward.1} parent=0 // pred_check
    _
  $region15: #{stgcn_forward.1} parent=0 // pred_check_branch
    %20 = sbr.rel (0) target = $region17
  $region16: #{stgcn_forward.1} parent=0 // pred_region
    _
  $region17: #{stgcn_forward.1} parent=0 // pred_fallthru
    _
  // Predicated region
  $region18: #{stgcn_forward.1} parent=0 // pred_check
    _
  $region19: #{stgcn_forward.1} parent=0 // pred_check_branch
    %22 = sbr.rel (0) target = $region21
  $region20: #{stgcn_forward.1} parent=0 // pred_region
    _
  $region21: #{stgcn_forward.1} parent=0 // pred_fallthru
    _
  // Predicated region
  $region22: #{stgcn_forward.1} parent=0 // pred_check
    _
  $region23: #{stgcn_forward.1} parent=0 // pred_check_branch
    %24 = sbr.rel (0) target = $region25
  $region24: #{stgcn_forward.1} parent=0 // pred_region
    _
  $region25: #{stgcn_forward.1} parent=0 // pred_fallthru
    _
  // Predicated region
  $region26: #{stgcn_forward.1} parent=0 // pred_check
    _
  $region27: #{stgcn_forward.1} parent=0 // pred_check_branch
    %26 = sbr.rel (0) target = $region29
  $region28: #{stgcn_forward.1} parent=0 // pred_region
    _
  $region29: #{stgcn_forward.1} parent=0 // pred_fallthru
    _
  // Predicated region
  $region30: #{stgcn_forward.1} parent=0 // pred_check
    _
  $region31: #{stgcn_forward.1} parent=0 // pred_check_branch
    %28 = sbr.rel (0) target = $region33
  $region32: #{stgcn_forward.1} parent=0 // pred_region
    _
  $region33: #{stgcn_forward.1} parent=0 // pred_fallthru
    _
  %v30 = vld [vmem:[%s0] sm:$0xf]
  %v31 = vld [vmem:[%s2] sm:$0xff]
  %v32 = vld [vmem:[%s2 + $0x8] sm:$0xff]
  %v33 = vld [vmem:[%s2 + $0x10] sm:$0xff]
  %v34 = vld [vmem:[%s2 + $0x18] sm:$0xff]
  %v35 = vld [vmem:[%s2 + $0x20] sm:$0xff]
  %v36 = vld [vmem:[%s2 + $0x28] sm:$0xff]
  %v37 = vld [vmem:[%s2 + $0x30] sm:$0xff]
  %v38 = vld [vmem:[%s2 + $0x38] sm:$0xff]
  %40 = vset.pattern.permute.xlu0 0
  %41 = vperm.xlu0 %40, %v31
  %v42 = vpop.permute.xlu0 %41
  %45 = vset.pattern.permute.xlu0 0
  %46 = vperm.xlu0 %45, %v32
  %v47 = vpop.permute.xlu0 %46
  %50 = vset.pattern.permute.xlu0 0
  %51 = vperm.xlu0 %50, %v33
  %v52 = vpop.permute.xlu0 %51
  %55 = vset.pattern.permute.xlu0 0
  %56 = vperm.xlu0 %55, %v34
  %v57 = vpop.permute.xlu0 %56
  %60 = vset.pattern.permute.xlu0 0
  %61 = vperm.xlu0 %60, %v35
  %v62 = vpop.permute.xlu0 %61
  %65 = vset.pattern.permute.xlu0 0
  %66 = vperm.xlu0 %65, %v36
  %v67 = vpop.permute.xlu0 %66
  %70 = vset.pattern.permute.xlu0 0
  %71 = vperm.xlu0 %70, %v37
  %v72 = vpop.permute.xlu0 %71
  %75 = vset.pattern.permute.xlu0 0
  %76 = vperm.xlu0 %75, %v38
  %v77 = vpop.permute.xlu0 %76
  %v80 = vlaneseq
  %v81 = vshrl.u32 %v80, 7
  %v82 = vsub.s32 0, %v81
  %v83 = vrot.slane %v30, %v82
  %v84 = vlaneseq
  %v85 = vshrl.u32 %v84, 7
  %v86 = vsub.s32 2, %v85
  %v87 = vrot.slane %v30, %v86
  %v90 = vlaneseq
  %v91 = vshrl.u32 %v90, 7
  %v92 = vsub.s32 0, %v91
  %v93 = vrot.slane %v83, %v92
  %v94 = vlaneseq
  %v95 = vshrl.u32 %v94, 7
  %v96 = vsub.s32 0, %v95
  %v97 = vrot.slane %v87, %v96
  %v98 = vmul.f32 %v42, %v93
  %v99 = vmul.f32 %v42, %v97
  %v100 = vmul.f32 %v47, %v93
  %v101 = vmul.f32 %v47, %v97
  %v102 = vmul.f32 %v52, %v93
  %v103 = vmul.f32 %v52, %v97
  %v104 = vmul.f32 %v57, %v93
  %v105 = vmul.f32 %v57, %v97
  %v106 = vmul.f32 %v62, %v93
  %v107 = vmul.f32 %v62, %v97
  %v108 = vmul.f32 %v67, %v93
  %v109 = vmul.f32 %v67, %v97
  %v110 = vmul.f32 %v72, %v93
  %v111 = vmul.f32 %v72, %v97
  %v112 = vmul.f32 %v77, %v93
  %v113 = vmul.f32 %v77, %v97
  %114 = vset.pattern.permute.xlu0 1
  %115 = vperm.xlu0 %114, %v31
  %v116 = vpop.permute.xlu0 %115
  %118 = vset.pattern.permute.xlu0 1
  %119 = vperm.xlu0 %118, %v32
  %v120 = vpop.permute.xlu0 %119
  %122 = vset.pattern.permute.xlu0 1
  %123 = vperm.xlu0 %122, %v33
  %v124 = vpop.permute.xlu0 %123
  %126 = vset.pattern.permute.xlu0 1
  %127 = vperm.xlu0 %126, %v34
  %v128 = vpop.permute.xlu0 %127
  %130 = vset.pattern.permute.xlu0 1
  %131 = vperm.xlu0 %130, %v35
  %v132 = vpop.permute.xlu0 %131
  %134 = vset.pattern.permute.xlu0 1
  %135 = vperm.xlu0 %134, %v36
  %v136 = vpop.permute.xlu0 %135
  %138 = vset.pattern.permute.xlu0 1
  %139 = vperm.xlu0 %138, %v37
  %v140 = vpop.permute.xlu0 %139
  %142 = vset.pattern.permute.xlu0 1
  %143 = vperm.xlu0 %142, %v38
  %v144 = vpop.permute.xlu0 %143
  %v146 = vlaneseq
  %v147 = vshrl.u32 %v146, 7
  %v148 = vsub.s32 1, %v147
  %v149 = vrot.slane %v30, %v148
  %v150 = vlaneseq
  %v151 = vshrl.u32 %v150, 7
  %v152 = vsub.s32 3, %v151
  %v153 = vrot.slane %v30, %v152
  %v156 = vlaneseq
  %v157 = vshrl.u32 %v156, 7
  %v158 = vsub.s32 1, %v157
  %v159 = vrot.slane %v149, %v158
  %v160 = vlaneseq
  %v161 = vshrl.u32 %v160, 7
  %v162 = vsub.s32 1, %v161
  %v163 = vrot.slane %v153, %v162
  %v164 = vmul.f32 %v116, %v159
  %v165 = vmul.f32 %v116, %v163
  %v166 = vmul.f32 %v120, %v159
  %v167 = vmul.f32 %v120, %v163
  %v168 = vmul.f32 %v124, %v159
  %v169 = vmul.f32 %v124, %v163
  %v170 = vmul.f32 %v128, %v159
  %v171 = vmul.f32 %v128, %v163
  %v172 = vmul.f32 %v132, %v159
  %v173 = vmul.f32 %v132, %v163
  %v174 = vmul.f32 %v136, %v159
  %v175 = vmul.f32 %v136, %v163
  %v176 = vmul.f32 %v140, %v159
  %v177 = vmul.f32 %v140, %v163
  %v178 = vmul.f32 %v144, %v159
  %v179 = vmul.f32 %v144, %v163
  %v180 = vadd.f32 %v98, %v164
  %v181 = vadd.f32 %v99, %v165
  %v182 = vadd.f32 %v100, %v166
  %v183 = vadd.f32 %v101, %v167
  %v184 = vadd.f32 %v102, %v168
  %v185 = vadd.f32 %v103, %v169
  %v186 = vadd.f32 %v104, %v170
  %v187 = vadd.f32 %v105, %v171
  %v188 = vadd.f32 %v106, %v172
  %v189 = vadd.f32 %v107, %v173
  %v190 = vadd.f32 %v108, %v174
  %v191 = vadd.f32 %v109, %v175
  %v192 = vadd.f32 %v110, %v176
  %v193 = vadd.f32 %v111, %v177
  %v194 = vadd.f32 %v112, %v178
  %v195 = vadd.f32 %v113, %v179
  %v196 = vpack.c.bf16 %v182, %v180
  %v197 = vpack.c.bf16 %v183, %v181
  %v198 = vpack.c.bf16 %v186, %v184
  %v199 = vpack.c.bf16 %v187, %v185
  %v200 = vpack.c.bf16 %v190, %v188
  %v201 = vpack.c.bf16 %v191, %v189
  %v202 = vpack.c.bf16 %v194, %v192
  %v203 = vpack.c.bf16 %v195, %v193
  %v204 = vld [vmem:[%s1] sm:$0xff]
  %v205 = vld [vmem:[%s1 + $0x8] sm:$0xff]
  %v206 = vld [vmem:[%s1 + $0x10] sm:$0xff]
  %v207 = vld [vmem:[%s1 + $0x18] sm:$0xff]
  %v208 = vld [vmem:[%s1 + $0x20] sm:$0xff]
  %v209 = vld [vmem:[%s1 + $0x28] sm:$0xff]
  %v210 = vld [vmem:[%s1 + $0x30] sm:$0xff]
  %v211 = vld [vmem:[%s1 + $0x38] sm:$0xff]
  %v212 = vld [vmem:[%s1 + $0x40] sm:$0xff]
  %v213 = vld [vmem:[%s1 + $0x48] sm:$0xff]
  %v214 = vld [vmem:[%s1 + $0x50] sm:$0xff]
  %v215 = vld [vmem:[%s1 + $0x58] sm:$0xff]
  %v216 = vld [vmem:[%s1 + $0x60] sm:$0xff]
  %v217 = vld [vmem:[%s1 + $0x68] sm:$0xff]
  %v218 = vld [vmem:[%s1 + $0x70] sm:$0xff]
  %v219 = vld [vmem:[%s1 + $0x78] sm:$0xff]
  %v220 = vld [vmem:[%s1 + $0x80] sm:$0xff]
  %v221 = vld [vmem:[%s1 + $0x88] sm:$0xff]
  %v222 = vld [vmem:[%s1 + $0x90] sm:$0xff]
  %v223 = vld [vmem:[%s1 + $0x98] sm:$0xff]
  %v224 = vld [vmem:[%s1 + $0xa0] sm:$0xff]
  %v225 = vld [vmem:[%s1 + $0xa8] sm:$0xff]
  %v226 = vld [vmem:[%s1 + $0xb0] sm:$0xff]
  %v227 = vld [vmem:[%s1 + $0xb8] sm:$0xff]
  %v228 = vld [vmem:[%s1 + $0xc0] sm:$0xff]
  %v229 = vld [vmem:[%s1 + $0xc8] sm:$0xff]
  %v230 = vld [vmem:[%s1 + $0xd0] sm:$0xff]
  %v231 = vld [vmem:[%s1 + $0xd8] sm:$0xff]
  %v232 = vld [vmem:[%s1 + $0xe0] sm:$0xff]
  %v233 = vld [vmem:[%s1 + $0xe8] sm:$0xff]
  %v234 = vld [vmem:[%s1 + $0xf0] sm:$0xff]
  %v235 = vld [vmem:[%s1 + $0xf8] sm:$0xff]
  %v236 = vld [vmem:[%s3] sm:$0xff]
  %v237 = vld [vmem:[%s3 + $0x8] sm:$0xff]
  %v238 = vld [vmem:[%s3 + $0x10] sm:$0xff]
  %v239 = vld [vmem:[%s3 + $0x18] sm:$0xff]
  %v240 = vld [vmem:[%s3 + $0x20] sm:$0xff]
  %v241 = vld [vmem:[%s3 + $0x28] sm:$0xff]
  %v242 = vld [vmem:[%s3 + $0x30] sm:$0xff]
  %v243 = vld [vmem:[%s3 + $0x38] sm:$0xff]
  %245 = vset.pattern.permute.xlu0 0
  %246 = vperm.xlu0 %245, %v236
  %v247 = vpop.permute.xlu0 %246
  %250 = vset.pattern.permute.xlu0 0
  %251 = vperm.xlu0 %250, %v237
  %v252 = vpop.permute.xlu0 %251
  %255 = vset.pattern.permute.xlu0 0
  %256 = vperm.xlu0 %255, %v238
  %v257 = vpop.permute.xlu0 %256
  %260 = vset.pattern.permute.xlu0 0
  %261 = vperm.xlu0 %260, %v239
  %v262 = vpop.permute.xlu0 %261
  %265 = vset.pattern.permute.xlu0 0
  %266 = vperm.xlu0 %265, %v240
  %v267 = vpop.permute.xlu0 %266
  %270 = vset.pattern.permute.xlu0 0
  %271 = vperm.xlu0 %270, %v241
  %v272 = vpop.permute.xlu0 %271
  %275 = vset.pattern.permute.xlu0 0
  %276 = vperm.xlu0 %275, %v242
  %v277 = vpop.permute.xlu0 %276
  %280 = vset.pattern.permute.xlu0 0
  %281 = vperm.xlu0 %280, %v243
  %v282 = vpop.permute.xlu0 %281
  %v316 = vunpack.c.l.b16 %v204
  %v317 = vunpack.c.h.b16 %v204
  %v318 = vunpack.c.l.b16 %v205
  %v319 = vunpack.c.h.b16 %v205
  %v320 = vunpack.c.l.b16 %v206
  %v321 = vunpack.c.h.b16 %v206
  %v322 = vunpack.c.l.b16 %v207
  %v323 = vunpack.c.h.b16 %v207
  %v324 = vunpack.c.l.b16 %v208
  %v325 = vunpack.c.h.b16 %v208
  %v326 = vunpack.c.l.b16 %v209
  %v327 = vunpack.c.h.b16 %v209
  %v328 = vunpack.c.l.b16 %v210
  %v329 = vunpack.c.h.b16 %v210
  %v330 = vunpack.c.l.b16 %v211
  %v331 = vunpack.c.h.b16 %v211
  %v332 = vunpack.c.l.b16 %v212
  %v333 = vunpack.c.h.b16 %v212
  %v334 = vunpack.c.l.b16 %v213
  %v335 = vunpack.c.h.b16 %v213
  %v336 = vunpack.c.l.b16 %v214
  %v337 = vunpack.c.h.b16 %v214
  %v338 = vunpack.c.l.b16 %v215
  %v339 = vunpack.c.h.b16 %v215
  %v340 = vunpack.c.l.b16 %v216
  %v341 = vunpack.c.h.b16 %v216
  %v342 = vunpack.c.l.b16 %v217
  %v343 = vunpack.c.h.b16 %v217
  %v344 = vunpack.c.l.b16 %v218
  %v345 = vunpack.c.h.b16 %v218
  %v346 = vunpack.c.l.b16 %v219
  %v347 = vunpack.c.h.b16 %v219
  %v348 = vunpack.c.l.b16 %v220
  %v349 = vunpack.c.h.b16 %v220
  %v350 = vunpack.c.l.b16 %v221
  %v351 = vunpack.c.h.b16 %v221
  %v352 = vunpack.c.l.b16 %v222
  %v353 = vunpack.c.h.b16 %v222
  %v354 = vunpack.c.l.b16 %v223
  %v355 = vunpack.c.h.b16 %v223
  %v356 = vunpack.c.l.b16 %v224
  %v357 = vunpack.c.h.b16 %v224
  %v358 = vunpack.c.l.b16 %v225
  %v359 = vunpack.c.h.b16 %v225
  %v360 = vunpack.c.l.b16 %v226
  %v361 = vunpack.c.h.b16 %v226
  %v362 = vunpack.c.l.b16 %v227
  %v363 = vunpack.c.h.b16 %v227
  %v364 = vunpack.c.l.b16 %v228
  %v365 = vunpack.c.h.b16 %v228
  %v366 = vunpack.c.l.b16 %v229
  %v367 = vunpack.c.h.b16 %v229
  %v368 = vunpack.c.l.b16 %v230
  %v369 = vunpack.c.h.b16 %v230
  %v370 = vunpack.c.l.b16 %v231
  %v371 = vunpack.c.h.b16 %v231
  %v372 = vunpack.c.l.b16 %v232
  %v373 = vunpack.c.h.b16 %v232
  %v374 = vunpack.c.l.b16 %v233
  %v375 = vunpack.c.h.b16 %v233
  %v376 = vunpack.c.l.b16 %v234
  %v377 = vunpack.c.h.b16 %v234
  %v378 = vunpack.c.l.b16 %v235
  %v379 = vunpack.c.h.b16 %v235
  %v380 = vpack.c.b16 %v318, %v316
  %v381 = vpack.c.b16 %v319, %v317
  %v382 = vpack.c.b16 %v322, %v320
  %v383 = vpack.c.b16 %v323, %v321
  %v384 = vpack.c.b16 %v326, %v324
  %v385 = vpack.c.b16 %v327, %v325
  %v386 = vpack.c.b16 %v330, %v328
  %v387 = vpack.c.b16 %v331, %v329
  %v388 = vpack.c.b16 %v334, %v332
  %v389 = vpack.c.b16 %v335, %v333
  %v390 = vpack.c.b16 %v338, %v336
  %v391 = vpack.c.b16 %v339, %v337
  %v392 = vpack.c.b16 %v342, %v340
  %v393 = vpack.c.b16 %v343, %v341
  %v394 = vpack.c.b16 %v346, %v344
  %v395 = vpack.c.b16 %v347, %v345
  %v396 = vpack.c.b16 %v350, %v348
  %v397 = vpack.c.b16 %v351, %v349
  %v398 = vpack.c.b16 %v354, %v352
  %v399 = vpack.c.b16 %v355, %v353
  %v400 = vpack.c.b16 %v358, %v356
  %v401 = vpack.c.b16 %v359, %v357
  %v402 = vpack.c.b16 %v362, %v360
  %v403 = vpack.c.b16 %v363, %v361
  %v404 = vpack.c.b16 %v366, %v364
  %v405 = vpack.c.b16 %v367, %v365
  %v406 = vpack.c.b16 %v370, %v368
  %v407 = vpack.c.b16 %v371, %v369
  %v408 = vpack.c.b16 %v374, %v372
  %v409 = vpack.c.b16 %v375, %v373
  %v410 = vpack.c.b16 %v378, %v376
  %v411 = vpack.c.b16 %v379, %v377
  %444 = vmatprep.subr.bf16.mxu0 %v381
  %445 = vmatpush1.bf16.msra.mxu0 %v380
  %446 = vmatprep.subr.bf16.mxu0 %v383
  %447 = vmatpush1.bf16.msra.mxu0 %v382
  %448 = vmatprep.subr.bf16.mxu0 %v385
  %449 = vmatpush1.bf16.msra.mxu0 %v384
  %450 = vmatprep.subr.bf16.mxu0 %v387
  %451 = vmatpush1.bf16.msra.mxu0 %v386
  %452 = vmatprep.subr.bf16.mxu0 %v389
  %453 = vmatpush1.bf16.msra.mxu0 %v388
  %454 = vmatprep.subr.bf16.mxu0 %v391
  %455 = vmatpush1.bf16.msra.mxu0 %v390
  %456 = vmatprep.subr.bf16.mxu0 %v393
  %457 = vmatpush1.bf16.msra.mxu0 %v392
  %458 = vmatprep.subr.bf16.mxu0 %v395
  %459 = vmatpush1.bf16.msra.mxu0 %v394
  %460 = vmatprep.subr.bf16.mxu0 %v397
  %461 = vmatpush1.bf16.msra.mxu0 %v396
  %462 = vmatprep.subr.bf16.mxu0 %v399
  %463 = vmatpush1.bf16.msra.mxu0 %v398
  %464 = vmatprep.subr.bf16.mxu0 %v401
  %465 = vmatpush1.bf16.msra.mxu0 %v400
  %466 = vmatprep.subr.bf16.mxu0 %v403
  %467 = vmatpush1.bf16.msra.mxu0 %v402
  %468 = vmatprep.subr.bf16.mxu0 %v405
  %469 = vmatpush1.bf16.msra.mxu0 %v404
  %470 = vmatprep.subr.bf16.mxu0 %v407
  %471 = vmatpush1.bf16.msra.mxu0 %v406
  %472 = vmatprep.subr.bf16.mxu0 %v409
  %473 = vmatpush1.bf16.msra.mxu0 %v408
  %474 = vmatprep.subr.bf16.mxu0 %v411
  %475 = vmatpush1.bf16.msra.mxu0 %v410
  %476 = vmatprep.mubr.bf16.mxu0 %v197
  %477 = vmatmul.mubr.bf16.gmra.mrb[0].mxu0 %v196
  %v478 = vpop.f32.mrb[0].mxu0
  %v479 = vadd.f32 %v247, %v478
  %v480 = vpop.f32.mrb[0].mxu0
  %v481 = vadd.f32 %v247, %v480
  %v482 = vpop.f32.mrb[0].mxu0
  %v483 = vadd.f32 %v252, %v482
  %v484 = vpop.f32.mrb[0].mxu0
  %v485 = vadd.f32 %v252, %v484
  %486 = vmatprep.mubr.bf16.mxu0 %v199
  %487 = vmatmul.mubr.bf16.gmra.mrb[0].mxu0 %v198
  %v488 = vpop.f32.mrb[0].mxu0
  %v489 = vadd.f32 %v257, %v488
  %v490 = vpop.f32.mrb[0].mxu0
  %v491 = vadd.f32 %v257, %v490
  %v492 = vpop.f32.mrb[0].mxu0
  %v493 = vadd.f32 %v262, %v492
  %v494 = vpop.f32.mrb[0].mxu0
  %v495 = vadd.f32 %v262, %v494
  %496 = vmatprep.mubr.bf16.mxu0 %v201
  %497 = vmatmul.mubr.bf16.gmra.mrb[0].mxu0 %v200
  %v498 = vpop.f32.mrb[0].mxu0
  %v499 = vadd.f32 %v267, %v498
  %v500 = vpop.f32.mrb[0].mxu0
  %v501 = vadd.f32 %v267, %v500
  %v502 = vpop.f32.mrb[0].mxu0
  %v503 = vadd.f32 %v272, %v502
  %v504 = vpop.f32.mrb[0].mxu0
  %v505 = vadd.f32 %v272, %v504
  %506 = vmatprep.mubr.bf16.mxu0 %v203
  %507 = vmatmul.mubr.bf16.gmra.mrb[0].mxu0 %v202
  %v508 = vpop.f32.mrb[0].mxu0
  %v509 = vadd.f32 %v277, %v508
  %v510 = vpop.f32.mrb[0].mxu0
  %v511 = vadd.f32 %v277, %v510
  %v512 = vpop.f32.mrb[0].mxu0
  %v513 = vadd.f32 %v282, %v512
  %v514 = vpop.f32.mrb[0].mxu0
  %v515 = vadd.f32 %v282, %v514
  %516 = vdwg.mxu0
  %v517 = vmax.f32 %v479, 0.0
  %v518 = vmax.f32 %v481, 0.0
  %v519 = vmax.f32 %v483, 0.0
  %v520 = vmax.f32 %v485, 0.0
  %v521 = vmax.f32 %v489, 0.0
  %v522 = vmax.f32 %v491, 0.0
  %v523 = vmax.f32 %v493, 0.0
  %v524 = vmax.f32 %v495, 0.0
  %v525 = vmax.f32 %v499, 0.0
  %v526 = vmax.f32 %v501, 0.0
  %v527 = vmax.f32 %v503, 0.0
  %v528 = vmax.f32 %v505, 0.0
  %v529 = vmax.f32 %v509, 0.0
  %v530 = vmax.f32 %v511, 0.0
  %v531 = vmax.f32 %v513, 0.0
  %v532 = vmax.f32 %v515, 0.0
  %533 = vrot.lane.b32.xlu0 %v517, 1
  %v534 = vpop.permute.xlu0 %533
  %535 = vrot.lane.b32.xlu0 %v519, 1
  %v536 = vpop.permute.xlu0 %535
  %537 = vrot.lane.b32.xlu0 %v521, 1
  %v538 = vpop.permute.xlu0 %537
  %539 = vrot.lane.b32.xlu0 %v523, 1
  %v540 = vpop.permute.xlu0 %539
  %541 = vrot.lane.b32.xlu0 %v525, 1
  %v542 = vpop.permute.xlu0 %541
  %543 = vrot.lane.b32.xlu0 %v527, 1
  %v544 = vpop.permute.xlu0 %543
  %545 = vrot.lane.b32.xlu0 %v529, 1
  %v546 = vpop.permute.xlu0 %545
  %547 = vrot.lane.b32.xlu0 %v531, 1
  %v548 = vpop.permute.xlu0 %547
  %549 = vrot.lane.b32.xlu0 %v518, 1
  %v550 = vpop.permute.xlu0 %549
  %551 = vrot.lane.b32.xlu0 %v520, 1
  %v552 = vpop.permute.xlu0 %551
  %553 = vrot.lane.b32.xlu0 %v522, 1
  %v554 = vpop.permute.xlu0 %553
  %555 = vrot.lane.b32.xlu0 %v524, 1
  %v556 = vpop.permute.xlu0 %555
  %557 = vrot.lane.b32.xlu0 %v526, 1
  %v558 = vpop.permute.xlu0 %557
  %559 = vrot.lane.b32.xlu0 %v528, 1
  %v560 = vpop.permute.xlu0 %559
  %561 = vrot.lane.b32.xlu0 %v530, 1
  %v562 = vpop.permute.xlu0 %561
  %563 = vrot.lane.b32.xlu0 %v532, 1
  %v564 = vpop.permute.xlu0 %563
  %v565 = vlaneseq
  %v566 = vand.u32 %v565, 127
  %vm567 = vcmp.lt.s32.totalorder %v566, 1
  %v568 = vsel %vm567, %v534, %v550
  %v569 = vsel %vm567, %v536, %v552
  %v570 = vsel %vm567, %v538, %v554
  %v571 = vsel %vm567, %v540, %v556
  %v572 = vsel %vm567, %v542, %v558
  %v573 = vsel %vm567, %v544, %v560
  %v574 = vsel %vm567, %v546, %v562
  %v575 = vsel %vm567, %v548, %v564
  %v576 = vsel %vm567, %v550, %v534
  %v577 = vsel %vm567, %v552, %v536
  %v578 = vsel %vm567, %v554, %v538
  %v579 = vsel %vm567, %v556, %v540
  %v580 = vsel %vm567, %v558, %v542
  %v581 = vsel %vm567, %v560, %v544
  %v582 = vsel %vm567, %v562, %v546
  %v583 = vsel %vm567, %v564, %v548
  %v584 = vld [vmem:[%s6] sm:$0x3]
  %v586 = vlaneseq
  %v587 = vshrl.u32 %v586, 7
  %v588 = vsub.s32 0, %v587
  %v589 = vrot.slane %v584, %v588
  %v590 = vlaneseq
  %v591 = vshrl.u32 %v590, 7
  %v592 = vsub.s32 1, %v591
  %v593 = vrot.slane %v584, %v592
  %v596 = vmul.f32 %v576, %v589
  %v597 = vmul.f32 %v568, %v593
  %v598 = vmul.f32 %v577, %v589
  %v599 = vmul.f32 %v569, %v593
  %v600 = vmul.f32 %v578, %v589
  %v601 = vmul.f32 %v570, %v593
  %v602 = vmul.f32 %v579, %v589
  %v603 = vmul.f32 %v571, %v593
  %v604 = vmul.f32 %v580, %v589
  %v605 = vmul.f32 %v572, %v593
  %v606 = vmul.f32 %v581, %v589
  %v607 = vmul.f32 %v573, %v593
  %v608 = vmul.f32 %v582, %v589
  %v609 = vmul.f32 %v574, %v593
  %v610 = vmul.f32 %v583, %v589
  %v611 = vmul.f32 %v575, %v593
  %612 = vrot.lane.b32.xlu0 %v517, 127
  %v613 = vpop.permute.xlu0 %612
  %614 = vrot.lane.b32.xlu0 %v519, 127
  %v615 = vpop.permute.xlu0 %614
  %616 = vrot.lane.b32.xlu0 %v521, 127
  %v617 = vpop.permute.xlu0 %616
  %618 = vrot.lane.b32.xlu0 %v523, 127
  %v619 = vpop.permute.xlu0 %618
  %620 = vrot.lane.b32.xlu0 %v525, 127
  %v621 = vpop.permute.xlu0 %620
  %622 = vrot.lane.b32.xlu0 %v527, 127
  %v623 = vpop.permute.xlu0 %622
  %624 = vrot.lane.b32.xlu0 %v529, 127
  %v625 = vpop.permute.xlu0 %624
  %626 = vrot.lane.b32.xlu0 %v531, 127
  %v627 = vpop.permute.xlu0 %626
  %628 = vrot.lane.b32.xlu0 %v518, 127
  %v629 = vpop.permute.xlu0 %628
  %630 = vrot.lane.b32.xlu0 %v520, 127
  %v631 = vpop.permute.xlu0 %630
  %632 = vrot.lane.b32.xlu0 %v522, 127
  %v633 = vpop.permute.xlu0 %632
  %634 = vrot.lane.b32.xlu0 %v524, 127
  %v635 = vpop.permute.xlu0 %634
  %636 = vrot.lane.b32.xlu0 %v526, 127
  %v637 = vpop.permute.xlu0 %636
  %638 = vrot.lane.b32.xlu0 %v528, 127
  %v639 = vpop.permute.xlu0 %638
  %640 = vrot.lane.b32.xlu0 %v530, 127
  %v641 = vpop.permute.xlu0 %640
  %642 = vrot.lane.b32.xlu0 %v532, 127
  %v643 = vpop.permute.xlu0 %642
  %vm644 = vcmp.lt.s32.totalorder %v566, 127
  %v645 = vsel %vm644, %v613, %v629
  %v646 = vsel %vm644, %v615, %v631
  %v647 = vsel %vm644, %v617, %v633
  %v648 = vsel %vm644, %v619, %v635
  %v649 = vsel %vm644, %v621, %v637
  %v650 = vsel %vm644, %v623, %v639
  %v651 = vsel %vm644, %v625, %v641
  %v652 = vsel %vm644, %v627, %v643
  %v653 = vsel %vm644, %v629, %v613
  %v654 = vsel %vm644, %v631, %v615
  %v655 = vsel %vm644, %v633, %v617
  %v656 = vsel %vm644, %v635, %v619
  %v657 = vsel %vm644, %v637, %v621
  %v658 = vsel %vm644, %v639, %v623
  %v659 = vsel %vm644, %v641, %v625
  %v660 = vsel %vm644, %v643, %v627
  %v661 = vld [vmem:[%s7] sm:$0x3]
  %v663 = vlaneseq
  %v664 = vshrl.u32 %v663, 7
  %v665 = vsub.s32 0, %v664
  %v666 = vrot.slane %v661, %v665
  %v667 = vlaneseq
  %v668 = vshrl.u32 %v667, 7
  %v669 = vsub.s32 1, %v668
  %v670 = vrot.slane %v661, %v669
  %v673 = vmul.f32 %v645, %v666
  %v674 = vmul.f32 %v653, %v670
  %v675 = vmul.f32 %v646, %v666
  %v676 = vmul.f32 %v654, %v670
  %v677 = vmul.f32 %v647, %v666
  %v678 = vmul.f32 %v655, %v670
  %v679 = vmul.f32 %v648, %v666
  %v680 = vmul.f32 %v656, %v670
  %v681 = vmul.f32 %v649, %v666
  %v682 = vmul.f32 %v657, %v670
  %v683 = vmul.f32 %v650, %v666
  %v684 = vmul.f32 %v658, %v670
  %v685 = vmul.f32 %v651, %v666
  %v686 = vmul.f32 %v659, %v670
  %v687 = vmul.f32 %v652, %v666
  %v688 = vmul.f32 %v660, %v670
  %v689 = vld [vmem:[%s4] sm:$0xf]
  %v690 = vld [vmem:[%s4 + $0x4] sm:$0xf]
  %v691 = vld [vmem:[%s4 + $0x8] sm:$0xf]
  %v692 = vld [vmem:[%s4 + $0xc] sm:$0xf]
  %v693 = vld [vmem:[%s4 + $0x10] sm:$0xf]
  %v694 = vld [vmem:[%s4 + $0x14] sm:$0xf]
  %v695 = vld [vmem:[%s4 + $0x18] sm:$0xf]
  %v696 = vld [vmem:[%s4 + $0x1c] sm:$0xf]
  %v697 = vpack.c.bf16 %v598, %v596
  %v698 = vpack.c.bf16 %v599, %v597
  %v699 = vpack.c.bf16 %v602, %v600
  %v700 = vpack.c.bf16 %v603, %v601
  %v701 = vpack.c.bf16 %v606, %v604
  %v702 = vpack.c.bf16 %v607, %v605
  %v703 = vpack.c.bf16 %v610, %v608
  %v704 = vpack.c.bf16 %v611, %v609
  %s705 = scalar_lea.vmem %s4, 32
  %v706 = vld [vmem:[%s705] sm:$0xf]
  %v707 = vld [vmem:[%s705 + $0x4] sm:$0xf]
  %v708 = vld [vmem:[%s705 + $0x8] sm:$0xf]
  %v709 = vld [vmem:[%s705 + $0xc] sm:$0xf]
  %v710 = vld [vmem:[%s705 + $0x10] sm:$0xf]
  %v711 = vld [vmem:[%s705 + $0x14] sm:$0xf]
  %v712 = vld [vmem:[%s705 + $0x18] sm:$0xf]
  %v713 = vld [vmem:[%s705 + $0x1c] sm:$0xf]
  %v714 = vpack.c.bf16 %v519, %v517
  %v715 = vpack.c.bf16 %v520, %v518
  %v716 = vpack.c.bf16 %v523, %v521
  %v717 = vpack.c.bf16 %v524, %v522
  %v718 = vpack.c.bf16 %v527, %v525
  %v719 = vpack.c.bf16 %v528, %v526
  %v720 = vpack.c.bf16 %v531, %v529
  %v721 = vpack.c.bf16 %v532, %v530
  %v730 = vunpack.c.l.b16 %v706
  %v731 = vunpack.c.l.b16 %v707
  %v732 = vunpack.c.l.b16 %v708
  %v733 = vunpack.c.l.b16 %v709
  %v734 = vunpack.c.l.b16 %v710
  %v735 = vunpack.c.l.b16 %v711
  %v736 = vunpack.c.l.b16 %v712
  %v737 = vunpack.c.l.b16 %v713
  %v738 = vpack.c.b16 %v731, %v730
  %v739 = vpack.c.b16 %v733, %v732
  %v740 = vpack.c.b16 %v735, %v734
  %v741 = vpack.c.b16 %v737, %v736
  %vm742 = vcmask 523264
  %v744 = vsel %vm742, %v738, 0
  %v747 = vsel %vm742, %v739, 0
  %v750 = vsel %vm742, %v740, 0
  %v753 = vsel %vm742, %v741, 0
  %755 = vmatprep.subr.bf16.mxu0 %v715
  %756 = vmatpush1.bf16.msra.mxu0 %v714
  %757 = vmatprep.subr.bf16.mxu0 %v717
  %758 = vmatpush1.bf16.msra.mxu0 %v716
  %759 = vmatprep.subr.bf16.mxu0 %v719
  %760 = vmatpush1.bf16.msra.mxu0 %v718
  %761 = vmatprep.subr.bf16.mxu0 %v721
  %762 = vmatpush1.bf16.msra.mxu0 %v720
  %763 = vmatprep.subr.bf16.mxu0 0
  %764 = vmatpush1.bf16.msra.mxu0 0
  %765 = vmatprep.subr.bf16.mxu0 0
  %766 = vmatpush1.bf16.msra.mxu0 0
  %767 = vmatprep.subr.bf16.mxu0 0
  %768 = vmatpush1.bf16.msra.mxu0 0
  %769 = vmatprep.subr.bf16.mxu0 0
  %770 = vmatpush1.bf16.msra.mxu0 0
  %771 = vmatprep.subr.bf16.mxu0 0
  %772 = vmatpush1.bf16.msra.mxu0 0
  %773 = vmatprep.subr.bf16.mxu0 0
  %774 = vmatpush1.bf16.msra.mxu0 0
  %775 = vmatprep.subr.bf16.mxu0 0
  %776 = vmatpush1.bf16.msra.mxu0 0
  %777 = vmatprep.subr.bf16.mxu0 0
  %778 = vmatpush1.bf16.msra.mxu0 0
  %779 = vmatprep.subr.bf16.mxu0 0
  %780 = vmatpush1.bf16.msra.mxu0 0
  %781 = vmatprep.subr.bf16.mxu0 0
  %782 = vmatpush1.bf16.msra.mxu0 0
  %783 = vmatprep.subr.bf16.mxu0 0
  %784 = vmatpush1.bf16.msra.mxu0 0
  %785 = vmatprep.subr.bf16.mxu0 0
  %786 = vmatpush1.bf16.msra.mxu0 0
  %787 = vmatprep.mubr.bf16.mxu0 0
  %788 = vmatmul.mubr.bf16.gmra.mrb[0].mxu0 %v744
  %v789 = vpop.f32.mrb[0].mxu0
  %v790 = vadd.f32 0.0, %v789
  %v791 = vpop.f32.mrb[0].mxu0
  %v792 = vadd.f32 0.0, %v791
  %v793 = vpop.f32.mrb[0].mxu0
  %v794 = vadd.f32 0.0, %v793
  %v795 = vpop.f32.mrb[0].mxu0
  %v796 = vadd.f32 0.0, %v795
  %797 = vmatprep.mubr.bf16.mxu0 0
  %798 = vmatmul.mubr.bf16.gmra.mrb[0].mxu0 %v747
  %v799 = vpop.f32.mrb[0].mxu0
  %v800 = vadd.f32 0.0, %v799
  %v801 = vpop.f32.mrb[0].mxu0
  %v802 = vadd.f32 0.0, %v801
  %v803 = vpop.f32.mrb[0].mxu0
  %v804 = vadd.f32 0.0, %v803
  %v805 = vpop.f32.mrb[0].mxu0
  %v806 = vadd.f32 0.0, %v805
  %807 = vmatprep.mubr.bf16.mxu0 0
  %808 = vmatmul.mubr.bf16.gmra.mrb[0].mxu0 %v750
  %v809 = vpop.f32.mrb[0].mxu0
  %v810 = vadd.f32 0.0, %v809
  %v811 = vpop.f32.mrb[0].mxu0
  %v812 = vadd.f32 0.0, %v811
  %v813 = vpop.f32.mrb[0].mxu0
  %v814 = vadd.f32 0.0, %v813
  %v815 = vpop.f32.mrb[0].mxu0
  %v816 = vadd.f32 0.0, %v815
  %817 = vmatprep.mubr.bf16.mxu0 0
  %818 = vmatmul.mubr.bf16.gmra.mrb[0].mxu0 %v753
  %v819 = vpop.f32.mrb[0].mxu0
  %v820 = vadd.f32 0.0, %v819
  %v821 = vpop.f32.mrb[0].mxu0
  %v822 = vadd.f32 0.0, %v821
  %v823 = vpop.f32.mrb[0].mxu0
  %v824 = vadd.f32 0.0, %v823
  %v825 = vpop.f32.mrb[0].mxu0
  %v826 = vadd.f32 0.0, %v825
  %827 = vdwg.mxu0
  %v836 = vunpack.c.l.b16 %v689
  %v837 = vunpack.c.l.b16 %v690
  %v838 = vunpack.c.l.b16 %v691
  %v839 = vunpack.c.l.b16 %v692
  %v840 = vunpack.c.l.b16 %v693
  %v841 = vunpack.c.l.b16 %v694
  %v842 = vunpack.c.l.b16 %v695
  %v843 = vunpack.c.l.b16 %v696
  %v844 = vpack.c.b16 %v837, %v836
  %v845 = vpack.c.b16 %v839, %v838
  %v846 = vpack.c.b16 %v841, %v840
  %v847 = vpack.c.b16 %v843, %v842
  %v849 = vsel %vm742, %v844, 0
  %v852 = vsel %vm742, %v845, 0
  %v855 = vsel %vm742, %v846, 0
  %v858 = vsel %vm742, %v847, 0
  %860 = vmatprep.subr.bf16.mxu0 %v698
  %861 = vmatpush1.bf16.msra.mxu0 %v697
  %862 = vmatprep.subr.bf16.mxu0 %v700
  %863 = vmatpush1.bf16.msra.mxu0 %v699
  %864 = vmatprep.subr.bf16.mxu0 %v702
  %865 = vmatpush1.bf16.msra.mxu0 %v701
  %866 = vmatprep.subr.bf16.mxu0 %v704
  %867 = vmatpush1.bf16.msra.mxu0 %v703
  %868 = vmatprep.subr.bf16.mxu0 0
  %869 = vmatpush1.bf16.msra.mxu0 0
  %870 = vmatprep.subr.bf16.mxu0 0
  %871 = vmatpush1.bf16.msra.mxu0 0
  %872 = vmatprep.subr.bf16.mxu0 0
  %873 = vmatpush1.bf16.msra.mxu0 0
  %874 = vmatprep.subr.bf16.mxu0 0
  %875 = vmatpush1.bf16.msra.mxu0 0
  %876 = vmatprep.subr.bf16.mxu0 0
  %877 = vmatpush1.bf16.msra.mxu0 0
  %878 = vmatprep.subr.bf16.mxu0 0
  %879 = vmatpush1.bf16.msra.mxu0 0
  %880 = vmatprep.subr.bf16.mxu0 0
  %881 = vmatpush1.bf16.msra.mxu0 0
  %882 = vmatprep.subr.bf16.mxu0 0
  %883 = vmatpush1.bf16.msra.mxu0 0
  %884 = vmatprep.subr.bf16.mxu0 0
  %885 = vmatpush1.bf16.msra.mxu0 0
  %886 = vmatprep.subr.bf16.mxu0 0
  %887 = vmatpush1.bf16.msra.mxu0 0
  %888 = vmatprep.subr.bf16.mxu0 0
  %889 = vmatpush1.bf16.msra.mxu0 0
  %890 = vmatprep.subr.bf16.mxu0 0
  %891 = vmatpush1.bf16.msra.mxu0 0
  %892 = vmatprep.mubr.bf16.mxu0 0
  %893 = vmatmul.mubr.bf16.gmra.mrb[0].mxu0 %v849
  %v894 = vpop.f32.mrb[0].mxu0
  %v895 = vadd.f32 %v790, %v894
  %v896 = vpop.f32.mrb[0].mxu0
  %v897 = vadd.f32 %v792, %v896
  %v898 = vpop.f32.mrb[0].mxu0
  %v899 = vadd.f32 %v794, %v898
  %v900 = vpop.f32.mrb[0].mxu0
  %v901 = vadd.f32 %v796, %v900
  %902 = vmatprep.mubr.bf16.mxu0 0
  %903 = vmatmul.mubr.bf16.gmra.mrb[0].mxu0 %v852
  %v904 = vpop.f32.mrb[0].mxu0
  %v905 = vadd.f32 %v800, %v904
  %v906 = vpop.f32.mrb[0].mxu0
  %v907 = vadd.f32 %v802, %v906
  %v908 = vpop.f32.mrb[0].mxu0
  %v909 = vadd.f32 %v804, %v908
  %v910 = vpop.f32.mrb[0].mxu0
  %v911 = vadd.f32 %v806, %v910
  %912 = vmatprep.mubr.bf16.mxu0 0
  %913 = vmatmul.mubr.bf16.gmra.mrb[0].mxu0 %v855
  %v914 = vpop.f32.mrb[0].mxu0
  %v915 = vadd.f32 %v810, %v914
  %v916 = vpop.f32.mrb[0].mxu0
  %v917 = vadd.f32 %v812, %v916
  %v918 = vpop.f32.mrb[0].mxu0
  %v919 = vadd.f32 %v814, %v918
  %v920 = vpop.f32.mrb[0].mxu0
  %v921 = vadd.f32 %v816, %v920
  %922 = vmatprep.mubr.bf16.mxu0 0
  %923 = vmatmul.mubr.bf16.gmra.mrb[0].mxu0 %v858
  %v924 = vpop.f32.mrb[0].mxu0
  %v925 = vadd.f32 %v820, %v924
  %v926 = vpop.f32.mrb[0].mxu0
  %v927 = vadd.f32 %v822, %v926
  %v928 = vpop.f32.mrb[0].mxu0
  %v929 = vadd.f32 %v824, %v928
  %v930 = vpop.f32.mrb[0].mxu0
  %v931 = vadd.f32 %v826, %v930
  %932 = vdwg.mxu0
  %s933 = scalar_lea.vmem %s4, 64
  %v934 = vld [vmem:[%s933] sm:$0xf]
  %v935 = vld [vmem:[%s933 + $0x4] sm:$0xf]
  %v936 = vld [vmem:[%s933 + $0x8] sm:$0xf]
  %v937 = vld [vmem:[%s933 + $0xc] sm:$0xf]
  %v938 = vld [vmem:[%s933 + $0x10] sm:$0xf]
  %v939 = vld [vmem:[%s933 + $0x14] sm:$0xf]
  %v940 = vld [vmem:[%s933 + $0x18] sm:$0xf]
  %v941 = vld [vmem:[%s933 + $0x1c] sm:$0xf]
  %v942 = vpack.c.bf16 %v675, %v673
  %v943 = vpack.c.bf16 %v676, %v674
  %v944 = vpack.c.bf16 %v679, %v677
  %v945 = vpack.c.bf16 %v680, %v678
  %v946 = vpack.c.bf16 %v683, %v681
  %v947 = vpack.c.bf16 %v684, %v682
  %v948 = vpack.c.bf16 %v687, %v685
  %v949 = vpack.c.bf16 %v688, %v686
  %v958 = vunpack.c.l.b16 %v934
  %v959 = vunpack.c.l.b16 %v935
  %v960 = vunpack.c.l.b16 %v936
  %v961 = vunpack.c.l.b16 %v937
  %v962 = vunpack.c.l.b16 %v938
  %v963 = vunpack.c.l.b16 %v939
  %v964 = vunpack.c.l.b16 %v940
  %v965 = vunpack.c.l.b16 %v941
  %v966 = vpack.c.b16 %v959, %v958
  %v967 = vpack.c.b16 %v961, %v960
  %v968 = vpack.c.b16 %v963, %v962
  %v969 = vpack.c.b16 %v965, %v964
  %v971 = vsel %vm742, %v966, 0
  %v974 = vsel %vm742, %v967, 0
  %v977 = vsel %vm742, %v968, 0
  %v980 = vsel %vm742, %v969, 0
  %982 = vmatprep.subr.bf16.mxu0 %v943
  %983 = vmatpush1.bf16.msra.mxu0 %v942
  %984 = vmatprep.subr.bf16.mxu0 %v945
  %985 = vmatpush1.bf16.msra.mxu0 %v944
  %986 = vmatprep.subr.bf16.mxu0 %v947
  %987 = vmatpush1.bf16.msra.mxu0 %v946
  %988 = vmatprep.subr.bf16.mxu0 %v949
  %989 = vmatpush1.bf16.msra.mxu0 %v948
  %990 = vmatprep.subr.bf16.mxu0 0
  %991 = vmatpush1.bf16.msra.mxu0 0
  %992 = vmatprep.subr.bf16.mxu0 0
  %993 = vmatpush1.bf16.msra.mxu0 0
  %994 = vmatprep.subr.bf16.mxu0 0
  %995 = vmatpush1.bf16.msra.mxu0 0
  %996 = vmatprep.subr.bf16.mxu0 0
  %997 = vmatpush1.bf16.msra.mxu0 0
  %998 = vmatprep.subr.bf16.mxu0 0
  %999 = vmatpush1.bf16.msra.mxu0 0
  %1000 = vmatprep.subr.bf16.mxu0 0
  %1001 = vmatpush1.bf16.msra.mxu0 0
  %1002 = vmatprep.subr.bf16.mxu0 0
  %1003 = vmatpush1.bf16.msra.mxu0 0
  %1004 = vmatprep.subr.bf16.mxu0 0
  %1005 = vmatpush1.bf16.msra.mxu0 0
  %1006 = vmatprep.subr.bf16.mxu0 0
  %1007 = vmatpush1.bf16.msra.mxu0 0
  %1008 = vmatprep.subr.bf16.mxu0 0
  %1009 = vmatpush1.bf16.msra.mxu0 0
  %1010 = vmatprep.subr.bf16.mxu0 0
  %1011 = vmatpush1.bf16.msra.mxu0 0
  %1012 = vmatprep.subr.bf16.mxu0 0
  %1013 = vmatpush1.bf16.msra.mxu0 0
  %1014 = vmatprep.mubr.bf16.mxu0 0
  %1015 = vmatmul.mubr.bf16.gmra.mrb[0].mxu0 %v971
  %v1016 = vpop.f32.mrb[0].mxu0
  %v1017 = vadd.f32 0.0, %v1016
  %v1018 = vpop.f32.mrb[0].mxu0
  %v1019 = vadd.f32 0.0, %v1018
  %v1020 = vpop.f32.mrb[0].mxu0
  %v1021 = vadd.f32 0.0, %v1020
  %v1022 = vpop.f32.mrb[0].mxu0
  %v1023 = vadd.f32 0.0, %v1022
  %1024 = vmatprep.mubr.bf16.mxu0 0
  %1025 = vmatmul.mubr.bf16.gmra.mrb[0].mxu0 %v974
  %v1026 = vpop.f32.mrb[0].mxu0
  %v1027 = vadd.f32 0.0, %v1026
  %v1028 = vpop.f32.mrb[0].mxu0
  %v1029 = vadd.f32 0.0, %v1028
  %v1030 = vpop.f32.mrb[0].mxu0
  %v1031 = vadd.f32 0.0, %v1030
  %v1032 = vpop.f32.mrb[0].mxu0
  %v1033 = vadd.f32 0.0, %v1032
  %1034 = vmatprep.mubr.bf16.mxu0 0
  %1035 = vmatmul.mubr.bf16.gmra.mrb[0].mxu0 %v977
  %v1036 = vpop.f32.mrb[0].mxu0
  %v1037 = vadd.f32 0.0, %v1036
  %v1038 = vpop.f32.mrb[0].mxu0
  %v1039 = vadd.f32 0.0, %v1038
  %v1040 = vpop.f32.mrb[0].mxu0
  %v1041 = vadd.f32 0.0, %v1040
  %v1042 = vpop.f32.mrb[0].mxu0
  %v1043 = vadd.f32 0.0, %v1042
  %1044 = vmatprep.mubr.bf16.mxu0 0
  %1045 = vmatmul.mubr.bf16.gmra.mrb[0].mxu0 %v980
  %v1046 = vpop.f32.mrb[0].mxu0
  %v1047 = vadd.f32 0.0, %v1046
  %v1048 = vpop.f32.mrb[0].mxu0
  %v1049 = vadd.f32 0.0, %v1048
  %v1050 = vpop.f32.mrb[0].mxu0
  %v1051 = vadd.f32 0.0, %v1050
  %v1052 = vpop.f32.mrb[0].mxu0
  %v1053 = vadd.f32 0.0, %v1052
  %1054 = vdwg.mxu0
  %v1055 = vadd.f32 %v895, %v1017
  %v1056 = vadd.f32 %v897, %v1019
  %v1057 = vadd.f32 %v899, %v1021
  %v1058 = vadd.f32 %v901, %v1023
  %v1059 = vadd.f32 %v905, %v1027
  %v1060 = vadd.f32 %v907, %v1029
  %v1061 = vadd.f32 %v909, %v1031
  %v1062 = vadd.f32 %v911, %v1033
  %v1063 = vadd.f32 %v915, %v1037
  %v1064 = vadd.f32 %v917, %v1039
  %v1065 = vadd.f32 %v919, %v1041
  %v1066 = vadd.f32 %v921, %v1043
  %v1067 = vadd.f32 %v925, %v1047
  %v1068 = vadd.f32 %v927, %v1049
  %v1069 = vadd.f32 %v929, %v1051
  %v1070 = vadd.f32 %v931, %v1053
  %v1071 = vld [vmem:[%s5] sm:$0xff]
  %v1072 = vld [vmem:[%s5 + $0x8] sm:$0xff]
  %v1073 = vld [vmem:[%s5 + $0x10] sm:$0xff]
  %v1074 = vld [vmem:[%s5 + $0x18] sm:$0xff]
  %v1075 = vld [vmem:[%s5 + $0x20] sm:$0xff]
  %v1076 = vld [vmem:[%s5 + $0x28] sm:$0xff]
  %v1077 = vld [vmem:[%s5 + $0x30] sm:$0xff]
  %v1078 = vld [vmem:[%s5 + $0x38] sm:$0xff]
  %1080 = vset.pattern.permute.xlu0 0
  %1081 = vperm.xlu0 %1080, %v1071
  %v1082 = vpop.permute.xlu0 %1081
  %1085 = vset.pattern.permute.xlu0 0
  %1086 = vperm.xlu0 %1085, %v1072
  %v1087 = vpop.permute.xlu0 %1086
  %1090 = vset.pattern.permute.xlu0 0
  %1091 = vperm.xlu0 %1090, %v1073
  %v1092 = vpop.permute.xlu0 %1091
  %1095 = vset.pattern.permute.xlu0 0
  %1096 = vperm.xlu0 %1095, %v1074
  %v1097 = vpop.permute.xlu0 %1096
  %1100 = vset.pattern.permute.xlu0 0
  %1101 = vperm.xlu0 %1100, %v1075
  %v1102 = vpop.permute.xlu0 %1101
  %1105 = vset.pattern.permute.xlu0 0
  %1106 = vperm.xlu0 %1105, %v1076
  %v1107 = vpop.permute.xlu0 %1106
  %1110 = vset.pattern.permute.xlu0 0
  %1111 = vperm.xlu0 %1110, %v1077
  %v1112 = vpop.permute.xlu0 %1111
  %1115 = vset.pattern.permute.xlu0 0
  %1116 = vperm.xlu0 %1115, %v1078
  %v1117 = vpop.permute.xlu0 %1116
  %v1119 = vadd.f32 %v1055, %v1082
  %v1120 = vadd.f32 %v1056, %v1082
  %v1121 = vadd.f32 %v1057, %v1087
  %v1122 = vadd.f32 %v1058, %v1087
  %v1123 = vadd.f32 %v1059, %v1092
  %v1124 = vadd.f32 %v1060, %v1092
  %v1125 = vadd.f32 %v1061, %v1097
  %v1126 = vadd.f32 %v1062, %v1097
  %v1127 = vadd.f32 %v1063, %v1102
  %v1128 = vadd.f32 %v1064, %v1102
  %v1129 = vadd.f32 %v1065, %v1107
  %v1130 = vadd.f32 %v1066, %v1107
  %v1131 = vadd.f32 %v1067, %v1112
  %v1132 = vadd.f32 %v1068, %v1112
  %v1133 = vadd.f32 %v1069, %v1117
  %v1134 = vadd.f32 %v1070, %v1117
  %1135 = vst [vmem:[%s8] sm:$0xff] %v1119
  %1136 = vst [vmem:[%s8 + $0x8] sm:$0xff] %v1120
  %1137 = vst [vmem:[%s8 + $0x10] sm:$0xff] %v1121
  %1138 = vst [vmem:[%s8 + $0x18] sm:$0xff] %v1122
  %1139 = vst [vmem:[%s8 + $0x20] sm:$0xff] %v1123
  %1140 = vst [vmem:[%s8 + $0x28] sm:$0xff] %v1124
  %1141 = vst [vmem:[%s8 + $0x30] sm:$0xff] %v1125
  %1142 = vst [vmem:[%s8 + $0x38] sm:$0xff] %v1126
  %1143 = vst [vmem:[%s8 + $0x40] sm:$0xff] %v1127
  %1144 = vst [vmem:[%s8 + $0x48] sm:$0xff] %v1128
  %1145 = vst [vmem:[%s8 + $0x50] sm:$0xff] %v1129
  %1146 = vst [vmem:[%s8 + $0x58] sm:$0xff] %v1130
  %1147 = vst [vmem:[%s8 + $0x60] sm:$0xff] %v1131
  %1148 = vst [vmem:[%s8 + $0x68] sm:$0xff] %v1132
  %1149 = vst [vmem:[%s8 + $0x70] sm:$0xff] %v1133
  %1150 = vst [vmem:[%s8 + $0x78] sm:$0xff] %v1134
  // Predicated region
  $region34: #{stgcn_forward.1} parent=0 // pred_check
    _
  $region35: #{stgcn_forward.1} parent=0 // pred_check_branch
    %1152 = sbr.rel (0) target = $region37
  $region36: #{stgcn_forward.1} parent=0 // pred_region
    _
  $region37: #{stgcn_forward.1} parent=0 // pred_fallthru
    _
  // Predicated region
  $region38: #{stgcn_forward.1} parent=0 // pred_check
    _
  $region39: #{stgcn_forward.1} parent=0 // pred_check_branch
    %1154 = sbr.rel (0) target = $region41
  $region40: #{stgcn_forward.1} parent=0 // pred_region
    _
  $region41: #{stgcn_forward.1} parent=0 // pred_fallthru
    _

</llo_original>
